<compile_context>
chip_gen: v6e
topology: v6e:2x2x1
jax: 0.10.0
libtpu: 0.0.40
codegen_flags: <defaults>
</compile_context>

<pallas_src>
import functools

import jax
import jax.numpy as jnp
from jax.experimental import pallas as pl
from jax.experimental.pallas import tpu as pltpu


def _round_up(x, m):
    return (x + m - 1) // m * m


def _probe_buffered_one():
    """Feature-probe: is pipeline_mode=pl.Buffered(1) accepted on pallas_call BlockSpecs?"""
    try:
        def _copy(x_ref, o_ref):
            o_ref[...] = x_ref[...]

        x = jnp.zeros((8, 128), jnp.float32)
        out = pl.pallas_call(
            _copy,
            out_shape=jax.ShapeDtypeStruct((8, 128), jnp.float32),
            grid=(1,),
            in_specs=[pl.BlockSpec((8, 128), lambda i: (0, 0),
                                   pipeline_mode=pl.Buffered(1))],
            out_specs=pl.BlockSpec((8, 128), lambda i: (0, 0)),
        )(x)
        jax.block_until_ready(out)
        return True
    except Exception:
        return False


_BUFFERED_ONE_OK = _probe_buffered_one()


def _invariant_spec(shape):
    """BlockSpec for a grid-invariant operand; single-buffered when supported."""
    if _BUFFERED_ONE_OK:
        return pl.BlockSpec(shape, lambda i: (0, 0), pipeline_mode=pl.Buffered(1))
    return pl.BlockSpec(shape, lambda i: (0, 0))


def _vmem_cap_bytes():
    try:
        return int(pltpu.get_tpu_info().vmem_capacity_bytes)
    except Exception:
        return 64 * 1024 * 1024  # conservative: v7x per-TensorCore VMEM


def merge_layer_kernel(x1_ref, x2_ref, w1a_ref, w1b_ref, b1_ref, w2_ref, b2_ref, out_ref):
    # fc1 on the *un-concatenated* halves: two MXU dots accumulated in f32.
    h = jnp.dot(x1_ref[...], w1a_ref[...], preferred_element_type=jnp.float32)
    h = h + jnp.dot(x2_ref[...], w1b_ref[...], preferred_element_type=jnp.float32)
    h = jnp.maximum(h + b1_ref[...], 0.0)             # bias + ReLU kept in f32 (VPU)
    # fc2: cast back to operand dtype for the MXU; accumulate in f32.
    z = jnp.dot(h.astype(w2_ref.dtype), w2_ref[...], preferred_element_type=jnp.float32)
    out_ref[...] = (z + b2_ref[...]).astype(out_ref.dtype)


@functools.partial(jax.jit, static_argnames=("tile_b", "use_bf16", "trim_output"))
def merge_layer(x1, x2, w1, b1, w2, b2, *, tile_b=None, use_bf16=True, trim_output=True):
    """MergeLayer forward: fc2(ReLU(fc1(concat(x1, x2)))).

    x1: [B, dim1], x2: [B, dim2]; w1: [dim1+dim2, dim3]; w2: [dim3, dim4]
    (weights stored as (in_features, out_features), i.e. transposed vs torch).

    use_bf16=True casts operands to bf16 for the MXU on every generation
    (v5e/v6e/v7x all take bf16 operands); accumulation, bias add and ReLU stay f32.
    trim_output=False returns the padded lane-dense (B_pad, O_pad) slab so downstream
    consumers can slice lazily instead of forcing an extra HBM pass here.
    """
    B, dim1 = x1.shape
    _, dim2 = x2.shape
    dim3 = w1.shape[1]
    dim4 = w2.shape[1]
    out_dtype = x1.dtype

    # ---- batch tiling: big sublane-friendly tiles; >=2 parallel steps when B is large ----
    if tile_b is None:
        b_round = _round_up(B, 16)
        if b_round <= 256:
            tile_b = b_round                               # single step: avoid per-step overhead
        else:
            tile_b = min(_round_up((b_round + 1) // 2, 16), 1024)  # >=2 steps (v7x megacore)
    else:
        tile_b = _round_up(int(tile_b), 16)
    B_pad = _round_up(B, tile_b)

    # ---- lane-dense feature padding only where it is free to keep (weights / output) ----
    H_pad = _round_up(dim3, 128)
    O_pad = _round_up(dim4, 128)

    # Activations: only row (batch) padding; last dims stay exact (block = full array dim).
    if B_pad != B:
        x1p = jnp.pad(x1, ((0, B_pad - B), (0, 0)))
        x2p = jnp.pad(x2, ((0, B_pad - B), (0, 0)))
    else:
        x1p, x2p = x1, x2

    # Weights: split W1 into the rows multiplying x1 and x2 (one-time, tiny wrapper ops).
    w1a = jnp.pad(w1[:dim1, :], ((0, 0), (0, H_pad - dim3)))
    w1b = jnp.pad(w1[dim1:, :], ((0, 0), (0, H_pad - dim3)))
    w2p = jnp.pad(w2, ((0, 0), (0, O_pad - dim4)))
    if H_pad != dim3:
        w2p = jnp.pad(w2p, ((0, H_pad - dim3), (0, 0)))
    b1p = jnp.pad(b1.astype(jnp.float32), (0, H_pad - dim3)).reshape(1, H_pad)
    b2p = jnp.pad(b2.astype(jnp.float32), (0, O_pad - dim4)).reshape(1, O_pad)

    if use_bf16:  # bf16 operands, f32 accumulation / bias / ReLU (correct on v5e/v6e/v7x)
        x1p = x1p.astype(jnp.bfloat16)
        x2p = x2p.astype(jnp.bfloat16)
        w1a = w1a.astype(jnp.bfloat16)
        w1b = w1b.astype(jnp.bfloat16)
        w2p = w2p.astype(jnp.bfloat16)

    op_dtype = x1p.dtype
    a_it = jnp.dtype(op_dtype).itemsize
    o_it = jnp.dtype(out_dtype).itemsize

    # ---- VMEM budget from actual buffer counts (streamed x/out x2, resident weights x1) ----
    w_bufs = 1 if _BUFFERED_ONE_OK else 2
    vmem_needed = (
        2 * tile_b * (dim1 + dim2) * a_it                    # streamed x1/x2 tiles
        + 2 * tile_b * O_pad * o_it                          # streamed output tile
        + w_bufs * ((dim1 + dim2) * H_pad + H_pad * O_pad) * a_it   # weights
        + w_bufs * (H_pad + O_pad) * 4                       # biases (f32)
        + tile_b * H_pad * 4                                 # f32 intermediate h
    )
    vmem_cap = _vmem_cap_bytes()
    vmem_limit = int(min(max(int(1.25 * vmem_needed), 16 * 1024 * 1024),
                         int(0.8 * vmem_cap)))

    # Advisory cost for the surrounding XLA graph: padded (actual) traffic / flops.
    cost = pl.CostEstimate(
        flops=int(2 * B_pad * ((dim1 + dim2) * H_pad + H_pad * O_pad)),
        transcendentals=0,
        bytes_accessed=int(
            B_pad * (dim1 + dim2) * a_it
            + ((dim1 + dim2) * H_pad + H_pad * O_pad) * a_it
            + (H_pad + O_pad) * 4
            + B_pad * O_pad * o_it),
    )

    grid = (B_pad // tile_b,)
    out_padded = pl.pallas_call(
        merge_layer_kernel,
        out_shape=jax.ShapeDtypeStruct((B_pad, O_pad), out_dtype),
        grid_spec=pltpu.PrefetchScalarGridSpec(
            num_scalar_prefetch=0,
            grid=grid,
            in_specs=[
                pl.BlockSpec((tile_b, dim1), lambda i: (i, 0)),   # x1 tile (streamed)
                pl.BlockSpec((tile_b, dim2), lambda i: (i, 0)),   # x2 tile (streamed)
                _invariant_spec((dim1, H_pad)),                   # W1 rows for x1 (resident)
                _invariant_spec((dim2, H_pad)),                   # W1 rows for x2 (resident)
                _invariant_spec((1, H_pad)),                      # b1
                _invariant_spec((H_pad, O_pad)),                  # W2
                _invariant_spec((1, O_pad)),                      # b2
            ],
            out_specs=pl.BlockSpec((tile_b, O_pad), lambda i: (i, 0)),
        ),
        compiler_params=pltpu.CompilerParams(
            dimension_semantics=("parallel",),
            vmem_limit_bytes=vmem_limit),
        cost_estimate=cost,
    )(x1p, x2p, w1a, w1b, b1p, w2p, b2p)

    if trim_output:
        return out_padded[:B, :dim4]
    return out_padded  # lane-dense (B_pad, O_pad) slab; slice lazily at the final consumer


def init_params(key, dim1, dim2, dim3, dim4, dtype=jnp.float32):
    """Xavier-normal weights; stored transposed vs torch, i.e. (in_features, out_features)."""
    k1, k2, k3, k4 = jax.random.split(key, 4)
    fan_in1, fan_out1 = dim1 + dim2, dim3
    fan_in2, fan_out2 = dim3, dim4
    std1 = (2.0 / (fan_in1 + fan_out1)) ** 0.5
    std2 = (2.0 / (fan_in2 + fan_out2)) ** 0.5
    w1 = std1 * jax.random.normal(k1, (fan_in1, dim3), dtype)
    w2 = std2 * jax.random.normal(k2, (dim3, dim4), dtype)
    # torch Linear default bias init: U(-1/sqrt(fan_in), 1/sqrt(fan_in))
    b1 = jax.random.uniform(k3, (dim3,), dtype,
                            minval=-1.0 / fan_in1 ** 0.5, maxval=1.0 / fan_in1 ** 0.5)
    b2 = jax.random.uniform(k4, (dim4,), dtype,
                            minval=-1.0 / fan_in2 ** 0.5, maxval=1.0 / fan_in2 ** 0.5)
    return w1, b1, w2, b2


def merge_layer_ref(x1, x2, w1, b1, w2, b2):
    x = jnp.concatenate([x1, x2], axis=1)
    h = jnp.maximum(jnp.dot(x, w1, precision="highest") + b1, 0.0)
    return jnp.dot(h, w2, precision="highest") + b2


if __name__ == "__main__":
    # Shapes consistent with the MergeLayer used by AttnModel inside TGATConv:
    # feat_dim = 32 -> MergeLayer(model_dim = 3*feat_dim, feat_dim, feat_dim, feat_dim), B = 16 nodes.
    feat_dim = 32
    B, dim1, dim2, dim3, dim4 = 16, 3 * feat_dim, feat_dim, feat_dim, feat_dim
    key = jax.random.PRNGKey(0)
    kx1, kx2, kp = jax.random.split(key, 3)
    x1 = jax.random.normal(kx1, (B, dim1), jnp.float32)
    x2 = jax.random.normal(kx2, (B, dim2), jnp.float32)
    w1, b1, w2, b2 = init_params(kp, dim1, dim2, dim3, dim4)

    ref = merge_layer_ref(x1, x2, w1, b1, w2, b2)

    # f32 operand path: matches the reference tightly.
    out_f32 = jax.block_until_ready(merge_layer(x1, x2, w1, b1, w2, b2, use_bf16=False))
    assert out_f32.shape == (B, dim4)
    assert jnp.allclose(out_f32, ref, atol=1e-4, rtol=1e-4), "f32 mismatch vs reference"

    # Default path: bf16 operands on the MXU, f32 accumulation -> bf16-level agreement.
    out_bf = jax.block_until_ready(merge_layer(x1, x2, w1, b1, w2, b2))
    assert out_bf.shape == (B, dim4)
    assert jnp.allclose(out_bf, ref, atol=1e-1, rtol=1e-1), "bf16 mismatch vs reference"

    # Ragged batch (exercises the zero-padded tail rows instead of a hard assert).
    out_r = jax.block_until_ready(merge_layer(x1[:13], x2[:13], w1, b1, w2, b2, use_bf16=False))
    assert out_r.shape == (13, dim4)
    assert jnp.allclose(out_r, ref[:13], atol=1e-4, rtol=1e-4), "ragged-batch mismatch"

    # Padded hand-off path: downstream consumers take the lane-dense slab and slice lazily.
    out_pad = jax.block_until_ready(merge_layer(x1, x2, w1, b1, w2, b2, trim_output=False))
    assert out_pad.shape[1] % 128 == 0 and out_pad.shape[0] % 16 == 0
    assert jnp.allclose(out_pad[:B, :dim4], ref, atol=1e-1, rtol=1e-1), "padded-output mismatch"

    print("KERNEL_OK")
</pallas_src>

<mosaic_0001>
module attributes {stable_mosaic.version = 11 : i64} {
  func.func @_copy(%arg0: i32, %arg1: memref<8x128xf32, #tpu.memory_space<vmem>>, %arg2: memref<8x128xf32, #tpu.memory_space<vmem>>) attributes {dimension_semantics = [#tpu.dimension_semantics<arbitrary>], iteration_bounds = array<i64: 1>, scalar_prefetch = 0 : i64, scratch_operands = 0 : i64, tpu.core_type = #tpu.core_type<tc>, window_params = [{pipeline_mode = #tpu.pipeline_mode<synchronous>, transform_indices = @transform_0, window_bounds = array<i64: 8, 128>}, {pipeline_mode = #tpu.pipeline_mode<synchronous>, transform_indices = @transform_1, window_bounds = array<i64: 8, 128>}]} {
    %c0 = arith.constant 0 : index
    %c0_0 = arith.constant 0 : index
    %0 = vector.load %arg1[%c0, %c0_0] : memref<8x128xf32, #tpu.memory_space<vmem>>, vector<8x128xf32>
    %c0_1 = arith.constant 0 : index
    %c0_2 = arith.constant 0 : index
    %1 = vector.load %arg2[%c0_1, %c0_2] : memref<8x128xf32, #tpu.memory_space<vmem>>, vector<8x128xf32>
    tpu.vector_store %arg2[%c0_1, %c0_2], %0 {strides = array<i32>} : memref<8x128xf32, #tpu.memory_space<vmem>>, vector<8x128xf32>,
    return
  }
  func.func @transform_0(%arg0: i32) -> (i32, i32) {
    %c0_i32 = arith.constant 0 : i32
    %c0_i32_0 = arith.constant 0 : i32
    %c0_i32_1 = arith.constant 0 : i32
    return %c0_i32, %c0_i32_0 : i32, i32
  }
  func.func @transform_1(%arg0: i32) -> (i32, i32) {
    %c0_i32 = arith.constant 0 : i32
    %c0_i32_0 = arith.constant 0 : i32
    %c0_i32_1 = arith.constant 0 : i32
    return %c0_i32, %c0_i32_0 : i32, i32
  }
}

module attributes {stable_mosaic.version = 11 : i64} {
  func.func @merge_layer_kernel(%arg0: i32, %arg1: memref<16x96xf32, #tpu.memory_space<vmem>>, %arg2: memref<16x32xf32, #tpu.memory_space<vmem>>, %arg3: memref<96x128xf32, #tpu.memory_space<vmem>>, %arg4: memref<32x128xf32, #tpu.memory_space<vmem>>, %arg5: memref<1x128xf32, #tpu.memory_space<vmem>>, %arg6: memref<128x128xf32, #tpu.memory_space<vmem>>, %arg7: memref<1x128xf32, #tpu.memory_space<vmem>>, %arg8: memref<16x128xf32, #tpu.memory_space<vmem>>) attributes {dimension_semantics = [#tpu.dimension_semantics<parallel>], iteration_bounds = array<i64: 1>, scalar_prefetch = 0 : i64, scratch_operands = 0 : i64, tpu.core_type = #tpu.core_type<tc>, window_params = [{transform_indices = @transform_0, window_bounds = array<i64: 16, 96>}, {transform_indices = @transform_1, window_bounds = array<i64: 16, 32>}, {pipeline_mode = #tpu.pipeline_mode<synchronous>, transform_indices = @transform_2, window_bounds = array<i64: 96, 128>}, {pipeline_mode = #tpu.pipeline_mode<synchronous>, transform_indices = @transform_3, window_bounds = array<i64: 32, 128>}, {pipeline_mode = #tpu.pipeline_mode<synchronous>, transform_indices = @transform_4, window_bounds = array<i64: 1, 128>}, {pipeline_mode = #tpu.pipeline_mode<synchronous>, transform_indices = @transform_5, window_bounds = array<i64: 128, 128>}, {pipeline_mode = #tpu.pipeline_mode<synchronous>, transform_indices = @transform_6, window_bounds = array<i64: 1, 128>}, {transform_indices = @transform_7, window_bounds = array<i64: 16, 128>}]} {
    %c0 = arith.constant 0 : index
    %c0_0 = arith.constant 0 : index
    %0 = vector.load %arg1[%c0, %c0_0] : memref<16x96xf32, #tpu.memory_space<vmem>>, vector<16x96xf32>
    %c0_1 = arith.constant 0 : index
    %c0_2 = arith.constant 0 : index
    %1 = vector.load %arg3[%c0_1, %c0_2] : memref<96x128xf32, #tpu.memory_space<vmem>>, vector<96x128xf32>
    %cst = arith.constant dense<0.000000e+00> : vector<16x128xf32>
    %2 = tpu.matmul %0, %1, %cst {dimension_numbers = #tpu.dot_dimension_numbers<[1], [0], [0], [1], [0, 0, 1, 1], [], []>} : vector<16x96xf32>, vector<96x128xf32>, vector<16x128xf32> -> vector<16x128xf32>
    %c0_3 = arith.constant 0 : index
    %c0_4 = arith.constant 0 : index
    %3 = vector.load %arg2[%c0_3, %c0_4] : memref<16x32xf32, #tpu.memory_space<vmem>>, vector<16x32xf32>
    %c0_5 = arith.constant 0 : index
    %c0_6 = arith.constant 0 : index
    %4 = vector.load %arg4[%c0_5, %c0_6] : memref<32x128xf32, #tpu.memory_space<vmem>>, vector<32x128xf32>
    %cst_7 = arith.constant dense<0.000000e+00> : vector<16x128xf32>
    %5 = tpu.matmul %3, %4, %cst_7 {dimension_numbers = #tpu.dot_dimension_numbers<[1], [0], [0], [1], [0, 0, 1, 1], [], []>} : vector<16x32xf32>, vector<32x128xf32>, vector<16x128xf32> -> vector<16x128xf32>
    %6 = arith.addf %2, %5 : vector<16x128xf32>
    %c0_8 = arith.constant 0 : index
    %c0_9 = arith.constant 0 : index
    %7 = vector.load %arg5[%c0_8, %c0_9] : memref<1x128xf32, #tpu.memory_space<vmem>>, vector<1x128xf32>
    %8 = vector.broadcast %7 : vector<1x128xf32> to vector<16x128xf32>
    %9 = arith.addf %6, %8 : vector<16x128xf32>
    %cst_10 = arith.constant 0.000000e+00 : f32
    %10 = vector.broadcast %cst_10 : f32 to vector<16x128xf32>
    %11 = arith.maximumf %9, %10 : vector<16x128xf32>
    %c0_11 = arith.constant 0 : index
    %c0_12 = arith.constant 0 : index
    %12 = vector.load %arg6[%c0_11, %c0_12] : memref<128x128xf32, #tpu.memory_space<vmem>>, vector<128x128xf32>
    %cst_13 = arith.constant dense<0.000000e+00> : vector<16x128xf32>
    %13 = tpu.matmul %11, %12, %cst_13 {dimension_numbers = #tpu.dot_dimension_numbers<[1], [0], [0], [1], [0, 0, 1, 1], [], []>} : vector<16x128xf32>, vector<128x128xf32>, vector<16x128xf32> -> vector<16x128xf32>
    %c0_14 = arith.constant 0 : index
    %c0_15 = arith.constant 0 : index
    %14 = vector.load %arg7[%c0_14, %c0_15] : memref<1x128xf32, #tpu.memory_space<vmem>>, vector<1x128xf32>
    %15 = vector.broadcast %14 : vector<1x128xf32> to vector<16x128xf32>
    %16 = arith.addf %13, %15 : vector<16x128xf32>
    %c0_16 = arith.constant 0 : index
    %c0_17 = arith.constant 0 : index
    %17 = vector.load %arg8[%c0_16, %c0_17] : memref<16x128xf32, #tpu.memory_space<vmem>>, vector<16x128xf32>
    tpu.vector_store %arg8[%c0_16, %c0_17], %16 {strides = array<i32>} : memref<16x128xf32, #tpu.memory_space<vmem>>, vector<16x128xf32>,
    return
  }
  func.func @transform_0(%arg0: i32) -> (i32, i32) {
    %c0_i32 = arith.constant 0 : i32
    %c0_i32_0 = arith.constant 0 : i32
    return %arg0, %c0_i32 : i32, i32
  }
  func.func @transform_1(%arg0: i32) -> (i32, i32) {
    %c0_i32 = arith.constant 0 : i32
    %c0_i32_0 = arith.constant 0 : i32
    return %arg0, %c0_i32 : i32, i32
  }
  func.func @transform_2(%arg0: i32) -> (i32, i32) {
    %c0_i32 = arith.constant 0 : i32
    %c0_i32_0 = arith.constant 0 : i32
    %c0_i32_1 = arith.constant 0 : i32
    return %c0_i32, %c0_i32_0 : i32, i32
  }
  func.func @transform_3(%arg0: i32) -> (i32, i32) {
    %c0_i32 = arith.constant 0 : i32
    %c0_i32_0 = arith.constant 0 : i32
    %c0_i32_1 = arith.constant 0 : i32
    return %c0_i32, %c0_i32_0 : i32, i32
  }
  func.func @transform_4(%arg0: i32) -> (i32, i32) {
    %c0_i32 = arith.constant 0 : i32
    %c0_i32_0 = arith.constant 0 : i32
    %c0_i32_1 = arith.constant 0 : i32
    return %c0_i32, %c0_i32_0 : i32, i32
  }
  func.func @transform_5(%arg0: i32) -> (i32, i32) {
    %c0_i32 = arith.constant 0 : i32
    %c0_i32_0 = arith.constant 0 : i32
    %c0_i32_1 = arith.constant 0 : i32
    return %c0_i32, %c0_i32_0 : i32, i32
  }
  func.func @transform_6(%arg0: i32) -> (i32, i32) {
    %c0_i32 = arith.constant 0 : i32
    %c0_i32_0 = arith.constant 0 : i32
    %c0_i32_1 = arith.constant 0 : i32
    return %c0_i32, %c0_i32_0 : i32, i32
  }
  func.func @transform_7(%arg0: i32) -> (i32, i32) {
    %c0_i32 = arith.constant 0 : i32
    %c0_i32_0 = arith.constant 0 : i32
    return %arg0, %c0_i32 : i32, i32
  }
}

</mosaic_0001>

<llo_original>
// kernel: tpu_custom_call.1
$region0: #{tpu_custom_call.1}
  #allocation0 [shape = 'u32[]', space=smem, size = 0x4, offset = 0x4, fixed_abs, tag = 'smem constant byte address 0x4 - core index']
  #allocation1 [shape = 'u32[144,128]{1,0:T(1,128)}', space=vmem, size = 0x12000, scoped, tag = 'internal scratch']
  %s0 = inlined_call_operand.hbm [shape: f32[8,128], index: 0, kind: input, shape index: {}]
  %s1 = inlined_call_operand.hbm [shape: f32[8,128], index: 1, kind: output, shape index: {}]
  %s2 = sld [smem:[#allocation0]]
  $region18: #{tpu_custom_call.1} parent=0
    _
  %s4 = ssub.s32 1, %s2
  %s5 = scalar_select 0, %s4, %s2
  $region1: #{tpu_custom_call.1} parent=0
    #allocation2 [shape = 'u8[4096]{0}', space=vmem, size = 0x1000, scoped, tag = 'input window, operand 0, single buffered']
    #allocation3 [shape = 's32[1]{0}', space=sflag, size = 0x4, scoped, tag = 'scoped memory for tpu_custom_call.1']
    #allocation4 [shape = 's32[1]{0}', space=sflag, size = 0x4, scoped, tag = 'scoped memory for tpu_custom_call.1']
    #allocation5 [shape = 'u8[4096]{0}', space=vmem, size = 0x1000, scoped, tag = 'output window, operand 0, single buffered']
    %6 = vsyncpa [#allocation3], 0
    %7 = vsyncpa [#allocation4], 0
    // Predicated region
    $region2: #{tpu_custom_call.1} parent=1 // pred_check
      _
    $region3: #{tpu_custom_call.1} parent=1 // pred_check_branch
      %9 = sbr.rel (0) target = $region5
    $region4: #{tpu_custom_call.1} parent=1 // pred_region
      %s11 = ssub.s32 128, 128
      %12 = vsyncadd [#allocation3], %s11
      %s14 = sshll.u32 [#allocation2], 4
      %s15 = int_to_ptr.vmem [resolvable:$true] %s14
      %17 = dma.hbm_to_vmem [thread:$0]  %s0, 128, %s15, [#allocation3]
    $region5: #{tpu_custom_call.1} parent=1 // pred_fallthru
      _
    // Predicated region
    $region6: #{tpu_custom_call.1} parent=1 // pred_check
      _
    $region7: #{tpu_custom_call.1} parent=1 // pred_check_branch
      %19 = sbr.rel (0) target = $region9
    $region8: #{tpu_custom_call.1} parent=1 // pred_region
      %20 = dma.done [#allocation3], 128
    $region9: #{tpu_custom_call.1} parent=1 // pred_fallthru
      _
    %v21 = vld [vmem:[#allocation2] sm:$0xff]
    %22 = vst [vmem:[#allocation5] sm:$0xff] %v21
    // Predicated region
    $region10: #{tpu_custom_call.1} parent=1 // pred_check
      _
    $region11: #{tpu_custom_call.1} parent=1 // pred_check_branch
      %24 = sbr.rel (0) target = $region13
    $region12: #{tpu_custom_call.1} parent=1 // pred_region
      %s26 = ssub.s32 128, 128
      %27 = vsyncadd [#allocation4], %s26
      %s29 = sshll.u32 [#allocation5], 4
      %s30 = int_to_ptr.vmem [resolvable:$true] %s29
      %32 = dma.vmem_to_hbm [thread:$0]  %s30, 128, %s1, [#allocation4]
    $region13: #{tpu_custom_call.1} parent=1 // pred_fallthru
      _
    // Predicated region
    $region14: #{tpu_custom_call.1} parent=1 // pred_check
      _
    $region15: #{tpu_custom_call.1} parent=1 // pred_check_branch
      %34 = sbr.rel (0) target = $region17
    $region16: #{tpu_custom_call.1} parent=1 // pred_region
      %35 = dma.done [#allocation4], 128
    $region17: #{tpu_custom_call.1} parent=1 // pred_fallthru
      _
    %36 = vsyncpa [#allocation3], 1
    %37 = vsyncpa [#allocation4], 1

// kernel: merge_layer.1
$region0: #{merge_layer.1}
  #allocation0 [shape = 'u32[]', space=smem, size = 0x4, offset = 0x4, fixed_abs, tag = 'smem constant byte address 0x4 - core index']
  #allocation1 [shape = 'u32[144,128]{1,0:T(1,128)}', space=vmem, size = 0x12000, scoped, tag = 'internal scratch']
  %s0 = inlined_call_operand.vmem [shape: f32[16,96], index: 0, kind: input, shape index: {}]
  %s1 = inlined_call_operand.vmem [shape: f32[16,32], index: 1, kind: input, shape index: {}]
  %s2 = inlined_call_operand.vmem [shape: f32[96,128], index: 2, kind: input, shape index: {}]
  %s3 = inlined_call_operand.vmem [shape: f32[32,128], index: 3, kind: input, shape index: {}]
  %s4 = inlined_call_operand.vmem [shape: f32[1,128], index: 4, kind: input, shape index: {}]
  %s5 = inlined_call_operand.vmem [shape: f32[128,128], index: 5, kind: input, shape index: {}]
  %s6 = inlined_call_operand.vmem [shape: f32[1,128], index: 6, kind: input, shape index: {}]
  %s7 = inlined_call_operand.hbm [shape: f32[16,128], index: 7, kind: output, shape index: {}]
  %s8 = sld [smem:[#allocation0]]
  $region38: #{merge_layer.1} parent=0
    _
  %s10 = ssub.s32 1, %s8
  %s11 = scalar_select 0, %s10, %s8
  $region1: #{merge_layer.1} parent=0
    #allocation2 [shape = 'u8[8192]{0}', space=vmem, size = 0x2000, scoped, tag = 'output window, operand 0, single buffered']
    #allocation3 [shape = 's32[1]{0}', space=sflag, size = 0x4, scoped, tag = 'scoped memory for merge_layer.1']
    %12 = vsyncpa [#allocation3], 0
    // Predicated region
    $region2: #{merge_layer.1} parent=1 // pred_check
      _
    $region3: #{merge_layer.1} parent=1 // pred_check_branch
      %14 = sbr.rel (0) target = $region5
    $region4: #{merge_layer.1} parent=1 // pred_region
      _
    $region5: #{merge_layer.1} parent=1 // pred_fallthru
      _
    // Predicated region
    $region6: #{merge_layer.1} parent=1 // pred_check
      _
    $region7: #{merge_layer.1} parent=1 // pred_check_branch
      %16 = sbr.rel (0) target = $region9
    $region8: #{merge_layer.1} parent=1 // pred_region
      _
    $region9: #{merge_layer.1} parent=1 // pred_fallthru
      _
    // Predicated region
    $region10: #{merge_layer.1} parent=1 // pred_check
      _
    $region11: #{merge_layer.1} parent=1 // pred_check_branch
      %18 = sbr.rel (0) target = $region13
    $region12: #{merge_layer.1} parent=1 // pred_region
      _
    $region13: #{merge_layer.1} parent=1 // pred_fallthru
      _
    // Predicated region
    $region14: #{merge_layer.1} parent=1 // pred_check
      _
    $region15: #{merge_layer.1} parent=1 // pred_check_branch
      %20 = sbr.rel (0) target = $region17
    $region16: #{merge_layer.1} parent=1 // pred_region
      _
    $region17: #{merge_layer.1} parent=1 // pred_fallthru
      _
    // Predicated region
    $region18: #{merge_layer.1} parent=1 // pred_check
      _
    $region19: #{merge_layer.1} parent=1 // pred_check_branch
      %22 = sbr.rel (0) target = $region21
    $region20: #{merge_layer.1} parent=1 // pred_region
      _
    $region21: #{merge_layer.1} parent=1 // pred_fallthru
      _
    // Predicated region
    $region22: #{merge_layer.1} parent=1 // pred_check
      _
    $region23: #{merge_layer.1} parent=1 // pred_check_branch
      %24 = sbr.rel (0) target = $region25
    $region24: #{merge_layer.1} parent=1 // pred_region
      _
    $region25: #{merge_layer.1} parent=1 // pred_fallthru
      _
    // Predicated region
    $region26: #{merge_layer.1} parent=1 // pred_check
      _
    $region27: #{merge_layer.1} parent=1 // pred_check_branch
      %26 = sbr.rel (0) target = $region29
    $region28: #{merge_layer.1} parent=1 // pred_region
      _
    $region29: #{merge_layer.1} parent=1 // pred_fallthru
      _
    %v27 = vld [vmem:[%s0] sm:$0xff]
    %v28 = vld [vmem:[%s0 + $0x8] sm:$0xff]
    %v29 = vld [vmem:[%s2] sm:$0xff]
    %v30 = vld [vmem:[%s2 + $0x8] sm:$0xff]
    %v31 = vld [vmem:[%s2 + $0x10] sm:$0xff]
    %v32 = vld [vmem:[%s2 + $0x18] sm:$0xff]
    %v33 = vld [vmem:[%s2 + $0x20] sm:$0xff]
    %v34 = vld [vmem:[%s2 + $0x28] sm:$0xff]
    %v35 = vld [vmem:[%s2 + $0x30] sm:$0xff]
    %v36 = vld [vmem:[%s2 + $0x38] sm:$0xff]
    %v37 = vld [vmem:[%s2 + $0x40] sm:$0xff]
    %v38 = vld [vmem:[%s2 + $0x48] sm:$0xff]
    %v39 = vld [vmem:[%s2 + $0x50] sm:$0xff]
    %v40 = vld [vmem:[%s2 + $0x58] sm:$0xff]
    %v41 = vld [vmem:[%s1] sm:$0xff]
    %v42 = vld [vmem:[%s1 + $0x8] sm:$0xff]
    %v43 = vld [vmem:[%s3] sm:$0xff]
    %v44 = vld [vmem:[%s3 + $0x8] sm:$0xff]
    %v45 = vld [vmem:[%s3 + $0x10] sm:$0xff]
    %v46 = vld [vmem:[%s3 + $0x18] sm:$0xff]
    %vm47 = vcmask 261120
    %v49 = vsel %vm47, %v41, 0
    %v52 = vsel %vm47, %v42, 0
    %54 = vmatprep.subr.mxu0 0.0
    %55 = vmatpush1.msra.mxu0 0.0
    %56 = vmatprep.subr.mxu0 0.0
    %57 = vmatpush1.msra.mxu0 0.0
    %58 = vmatprep.subr.mxu0 0.0
    %59 = vmatpush1.msra.mxu0 0.0
    %60 = vmatprep.subr.mxu0 0.0
    %61 = vmatpush1.msra.mxu0 0.0
    %62 = vmatprep.subr.mxu0 0.0
    %63 = vmatpush1.msra.mxu0 0.0
    %64 = vmatprep.subr.mxu0 0.0
    %65 = vmatpush1.msra.mxu0 0.0
    %66 = vmatprep.subr.mxu0 0.0
    %67 = vmatpush1.msra.mxu0 0.0
    %68 = vmatprep.subr.mxu0 0.0
    %69 = vmatpush1.msra.mxu0 0.0
    %70 = vmatprep.subr.mxu0 0.0
    %71 = vmatpush1.msra.mxu0 0.0
    %72 = vmatprep.subr.mxu0 0.0
    %73 = vmatpush1.msra.mxu0 0.0
    %74 = vmatprep.subr.mxu0 0.0
    %75 = vmatpush1.msra.mxu0 0.0
    %76 = vmatprep.subr.mxu0 0.0
    %77 = vmatpush1.msra.mxu0 0.0
    %78 = vmatprep.subr.mxu0 0.0
    %79 = vmatpush1.msra.mxu0 %v46
    %80 = vmatprep.subr.mxu0 0.0
    %81 = vmatpush1.msra.mxu0 %v45
    %82 = vmatprep.subr.mxu0 0.0
    %83 = vmatpush1.msra.mxu0 %v44
    %84 = vmatprep.subr.mxu0 0.0
    %85 = vmatpush1.msra.mxu0 %v43
    %86 = vmatprep.subr.mxu0 0.0
    %87 = vmatpush2.msra.mxu0 0.0
    %88 = vmatprep.subr.mxu0 0.0
    %89 = vmatpush2.msra.mxu0 0.0
    %90 = vmatprep.subr.mxu0 0.0
    %91 = vmatpush2.msra.mxu0 0.0
    %92 = vmatprep.subr.mxu0 0.0
    %93 = vmatpush2.msra.mxu0 0.0
    %94 = vmatprep.subr.mxu0 0.0
    %95 = vmatpush2.msra.mxu0 0.0
    %96 = vmatprep.subr.mxu0 0.0
    %97 = vmatpush2.msra.mxu0 0.0
    %98 = vmatprep.subr.mxu0 0.0
    %99 = vmatpush2.msra.mxu0 0.0
    %100 = vmatprep.subr.mxu0 0.0
    %101 = vmatpush2.msra.mxu0 0.0
    %102 = vmatprep.subr.mxu0 0.0
    %103 = vmatpush2.msra.mxu0 0.0
    %104 = vmatprep.subr.mxu0 0.0
    %105 = vmatpush2.msra.mxu0 0.0
    %106 = vmatprep.subr.mxu0 0.0
    %107 = vmatpush2.msra.mxu0 0.0
    %108 = vmatprep.subr.mxu0 0.0
    %109 = vmatpush2.msra.mxu0 0.0
    %110 = vmatprep.subr.mxu0 0.0
    %111 = vmatpush2.msra.mxu0 0.0
    %112 = vmatprep.subr.mxu0 0.0
    %113 = vmatpush2.msra.mxu0 0.0
    %114 = vmatprep.subr.mxu0 0.0
    %115 = vmatpush2.msra.mxu0 0.0
    %116 = vmatprep.subr.mxu0 0.0
    %117 = vmatpush2.msra.mxu0 0.0
    %118 = vmatprep.mubr.f32.mxu0 0.0
    %119 = vmatmul.mubr.f32.gmra.mxu0 %v49
    %v120 = vpop.f32.mrf.mxu0
    %v121 = vadd.f32 0.0, %v120
    %v122 = vpop.f32.mrf.mxu0
    %123 = vmatprep.mubr.f32.mxu0 0.0
    %124 = vmatmul.mubr.f32.gmra.mxu0 %v52
    %v125 = vpop.f32.mrf.mxu0
    %v126 = vadd.f32 0.0, %v125
    %v127 = vpop.f32.mrf.mxu0
    %128 = vdwg.mxu0
    %vm129 = vcmask 785408
    %v131 = vsel %vm129, %v27, 0
    %v134 = vsel %vm129, %v28, 0
    %136 = vmatprep.subr.mxu0 0.0
    %137 = vmatpush1.msra.mxu0 0.0
    %138 = vmatprep.subr.mxu0 0.0
    %139 = vmatpush1.msra.mxu0 0.0
    %140 = vmatprep.subr.mxu0 0.0
    %141 = vmatpush1.msra.mxu0 0.0
    %142 = vmatprep.subr.mxu0 0.0
    %143 = vmatpush1.msra.mxu0 0.0
    %144 = vmatprep.subr.mxu0 0.0
    %145 = vmatpush1.msra.mxu0 %v40
    %146 = vmatprep.subr.mxu0 0.0
    %147 = vmatpush1.msra.mxu0 %v39
    %148 = vmatprep.subr.mxu0 0.0
    %149 = vmatpush1.msra.mxu0 %v38
    %150 = vmatprep.subr.mxu0 0.0
    %151 = vmatpush1.msra.mxu0 %v37
    %152 = vmatprep.subr.mxu0 0.0
    %153 = vmatpush1.msra.mxu0 %v36
    %154 = vmatprep.subr.mxu0 0.0
    %155 = vmatpush1.msra.mxu0 %v35
    %156 = vmatprep.subr.mxu0 0.0
    %157 = vmatpush1.msra.mxu0 %v34
    %158 = vmatprep.subr.mxu0 0.0
    %159 = vmatpush1.msra.mxu0 %v33
    %160 = vmatprep.subr.mxu0 0.0
    %161 = vmatpush1.msra.mxu0 %v32
    %162 = vmatprep.subr.mxu0 0.0
    %163 = vmatpush1.msra.mxu0 %v31
    %164 = vmatprep.subr.mxu0 0.0
    %165 = vmatpush1.msra.mxu0 %v30
    %166 = vmatprep.subr.mxu0 0.0
    %167 = vmatpush1.msra.mxu0 %v29
    %168 = vmatprep.subr.mxu0 0.0
    %169 = vmatpush2.msra.mxu0 0.0
    %170 = vmatprep.subr.mxu0 0.0
    %171 = vmatpush2.msra.mxu0 0.0
    %172 = vmatprep.subr.mxu0 0.0
    %173 = vmatpush2.msra.mxu0 0.0
    %174 = vmatprep.subr.mxu0 0.0
    %175 = vmatpush2.msra.mxu0 0.0
    %176 = vmatprep.subr.mxu0 0.0
    %177 = vmatpush2.msra.mxu0 0.0
    %178 = vmatprep.subr.mxu0 0.0
    %179 = vmatpush2.msra.mxu0 0.0
    %180 = vmatprep.subr.mxu0 0.0
    %181 = vmatpush2.msra.mxu0 0.0
    %182 = vmatprep.subr.mxu0 0.0
    %183 = vmatpush2.msra.mxu0 0.0
    %184 = vmatprep.subr.mxu0 0.0
    %185 = vmatpush2.msra.mxu0 0.0
    %186 = vmatprep.subr.mxu0 0.0
    %187 = vmatpush2.msra.mxu0 0.0
    %188 = vmatprep.subr.mxu0 0.0
    %189 = vmatpush2.msra.mxu0 0.0
    %190 = vmatprep.subr.mxu0 0.0
    %191 = vmatpush2.msra.mxu0 0.0
    %192 = vmatprep.subr.mxu0 0.0
    %193 = vmatpush2.msra.mxu0 0.0
    %194 = vmatprep.subr.mxu0 0.0
    %195 = vmatpush2.msra.mxu0 0.0
    %196 = vmatprep.subr.mxu0 0.0
    %197 = vmatpush2.msra.mxu0 0.0
    %198 = vmatprep.subr.mxu0 0.0
    %199 = vmatpush2.msra.mxu0 0.0
    %200 = vmatprep.mubr.f32.mxu0 0.0
    %201 = vmatmul.mubr.f32.gmra.mxu0 %v131
    %v202 = vpop.f32.mrf.mxu0
    %v203 = vadd.f32 %v121, %v202
    %v204 = vpop.f32.mrf.mxu0
    %205 = vmatprep.mubr.f32.mxu0 0.0
    %206 = vmatmul.mubr.f32.gmra.mxu0 %v134
    %v207 = vpop.f32.mrf.mxu0
    %v208 = vadd.f32 %v126, %v207
    %v209 = vpop.f32.mrf.mxu0
    %210 = vdwg.mxu0
    %v211 = vld [vmem:[%s4] sm:$0x1]
    %v213 = vlaneseq
    %v214 = vshrl.u32 %v213, 7
    %v215 = vsub.s32 0, %v214
    %v216 = vrot.slane %v211, %v215
    %v218 = vadd.f32 %v203, %v216
    %v219 = vadd.f32 %v208, %v216
    %v220 = vmax.f32 %v218, 0.0
    %v221 = vmax.f32 %v219, 0.0
    %v222 = vld [vmem:[%s5] sm:$0xff]
    %v223 = vld [vmem:[%s5 + $0x8] sm:$0xff]
    %v224 = vld [vmem:[%s5 + $0x10] sm:$0xff]
    %v225 = vld [vmem:[%s5 + $0x18] sm:$0xff]
    %v226 = vld [vmem:[%s5 + $0x20] sm:$0xff]
    %v227 = vld [vmem:[%s5 + $0x28] sm:$0xff]
    %v228 = vld [vmem:[%s5 + $0x30] sm:$0xff]
    %v229 = vld [vmem:[%s5 + $0x38] sm:$0xff]
    %v230 = vld [vmem:[%s5 + $0x40] sm:$0xff]
    %v231 = vld [vmem:[%s5 + $0x48] sm:$0xff]
    %v232 = vld [vmem:[%s5 + $0x50] sm:$0xff]
    %v233 = vld [vmem:[%s5 + $0x58] sm:$0xff]
    %v234 = vld [vmem:[%s5 + $0x60] sm:$0xff]
    %v235 = vld [vmem:[%s5 + $0x68] sm:$0xff]
    %v236 = vld [vmem:[%s5 + $0x70] sm:$0xff]
    %v237 = vld [vmem:[%s5 + $0x78] sm:$0xff]
    %v238 = vld [vmem:[%s6] sm:$0x1]
    %v240 = vlaneseq
    %v241 = vshrl.u32 %v240, 7
    %v242 = vsub.s32 0, %v241
    %v243 = vrot.slane %v238, %v242
    %245 = vmatprep.subr.mxu0 0.0
    %246 = vmatpush1.msra.mxu0 %v237
    %247 = vmatprep.subr.mxu0 0.0
    %248 = vmatpush1.msra.mxu0 %v236
    %249 = vmatprep.subr.mxu0 0.0
    %250 = vmatpush1.msra.mxu0 %v235
    %251 = vmatprep.subr.mxu0 0.0
    %252 = vmatpush1.msra.mxu0 %v234
    %253 = vmatprep.subr.mxu0 0.0
    %254 = vmatpush1.msra.mxu0 %v233
    %255 = vmatprep.subr.mxu0 0.0
    %256 = vmatpush1.msra.mxu0 %v232
    %257 = vmatprep.subr.mxu0 0.0
    %258 = vmatpush1.msra.mxu0 %v231
    %259 = vmatprep.subr.mxu0 0.0
    %260 = vmatpush1.msra.mxu0 %v230
    %261 = vmatprep.subr.mxu0 0.0
    %262 = vmatpush1.msra.mxu0 %v229
    %263 = vmatprep.subr.mxu0 0.0
    %264 = vmatpush1.msra.mxu0 %v228
    %265 = vmatprep.subr.mxu0 0.0
    %266 = vmatpush1.msra.mxu0 %v227
    %267 = vmatprep.subr.mxu0 0.0
    %268 = vmatpush1.msra.mxu0 %v226
    %269 = vmatprep.subr.mxu0 0.0
    %270 = vmatpush1.msra.mxu0 %v225
    %271 = vmatprep.subr.mxu0 0.0
    %272 = vmatpush1.msra.mxu0 %v224
    %273 = vmatprep.subr.mxu0 0.0
    %274 = vmatpush1.msra.mxu0 %v223
    %275 = vmatprep.subr.mxu0 0.0
    %276 = vmatpush1.msra.mxu0 %v222
    %277 = vmatprep.subr.mxu0 0.0
    %278 = vmatpush2.msra.mxu0 0.0
    %279 = vmatprep.subr.mxu0 0.0
    %280 = vmatpush2.msra.mxu0 0.0
    %281 = vmatprep.subr.mxu0 0.0
    %282 = vmatpush2.msra.mxu0 0.0
    %283 = vmatprep.subr.mxu0 0.0
    %284 = vmatpush2.msra.mxu0 0.0
    %285 = vmatprep.subr.mxu0 0.0
    %286 = vmatpush2.msra.mxu0 0.0
    %287 = vmatprep.subr.mxu0 0.0
    %288 = vmatpush2.msra.mxu0 0.0
    %289 = vmatprep.subr.mxu0 0.0
    %290 = vmatpush2.msra.mxu0 0.0
    %291 = vmatprep.subr.mxu0 0.0
    %292 = vmatpush2.msra.mxu0 0.0
    %293 = vmatprep.subr.mxu0 0.0
    %294 = vmatpush2.msra.mxu0 0.0
    %295 = vmatprep.subr.mxu0 0.0
    %296 = vmatpush2.msra.mxu0 0.0
    %297 = vmatprep.subr.mxu0 0.0
    %298 = vmatpush2.msra.mxu0 0.0
    %299 = vmatprep.subr.mxu0 0.0
    %300 = vmatpush2.msra.mxu0 0.0
    %301 = vmatprep.subr.mxu0 0.0
    %302 = vmatpush2.msra.mxu0 0.0
    %303 = vmatprep.subr.mxu0 0.0
    %304 = vmatpush2.msra.mxu0 0.0
    %305 = vmatprep.subr.mxu0 0.0
    %306 = vmatpush2.msra.mxu0 0.0
    %307 = vmatprep.subr.mxu0 0.0
    %308 = vmatpush2.msra.mxu0 0.0
    %309 = vmatprep.mubr.f32.mxu0 0.0
    %310 = vmatmul.mubr.f32.gmra.mxu0 %v220
    %v311 = vpop.f32.mrf.mxu0
    %v312 = vadd.f32 %v243, %v311
    %v313 = vpop.f32.mrf.mxu0
    %314 = vmatprep.mubr.f32.mxu0 0.0
    %315 = vmatmul.mubr.f32.gmra.mxu0 %v221
    %v316 = vpop.f32.mrf.mxu0
    %v317 = vadd.f32 %v243, %v316
    %v318 = vpop.f32.mrf.mxu0
    %319 = vdwg.mxu0
    %320 = vst [vmem:[#allocation2] sm:$0xff] %v312
    %321 = vst [vmem:[#allocation2 + $0x8] sm:$0xff] %v317
    // Predicated region
    $region30: #{merge_layer.1} parent=1 // pred_check
      _
    $region31: #{merge_layer.1} parent=1 // pred_check_branch
      %323 = sbr.rel (0) target = $region33
    $region32: #{merge_layer.1} parent=1 // pred_region
      %s325 = ssub.s32 256, 256
      %326 = vsyncadd [#allocation3], %s325
      %s327 = sshll.u32 [#allocation2], 4
      %s328 = int_to_ptr.vmem [resolvable:$true] %s327
      %333 = dma.vmem_to_hbm [thread:$0]  %s328, 256, %s7, [#allocation3], 128, 128, 8
    $region33: #{merge_layer.1} parent=1 // pred_fallthru
      _
    // Predicated region
    $region34: #{merge_layer.1} parent=1 // pred_check
      _
    $region35: #{merge_layer.1} parent=1 // pred_check_branch
      %335 = sbr.rel (0) target = $region37
    $region36: #{merge_layer.1} parent=1 // pred_region
      %336 = dma.done [#allocation3], 256
    $region37: #{merge_layer.1} parent=1 // pred_fallthru
      _
    %337 = vsyncpa [#allocation3], 1

</llo_original>
